<compile_context>
chip_gen: v7x
topology: tpu7x:2x2x1
jax: 0.10.0
libtpu: 0.0.40
codegen_flags: <defaults>
</compile_context>

<pallas_src>
import math

import jax
import jax.numpy as jnp
from jax.experimental import pallas as pl
from jax.experimental.pallas import tpu as pltpu


def _round_up(x: int, m: int) -> int:
    return ((x + m - 1) // m) * m


def _make_glu_kernel(tn: int, approx_sigmoid: bool):
    """Fused Linear -> GLU(dim=-1) -> ReLU on one (row-tile, out-col-tile)."""

    def kernel(x_ref, w_ref, b_ref, o_ref):
        # x_ref : (tm, K)      stored dtype (bf16/f32) fed straight to the MXU
        # w_ref : (K, 2*tn)    [W_a tile | W_g tile] for this output-col tile
        # b_ref : (1, 2*tn)    [b_a tile | b_g tile]
        # o_ref : (tm, tn)
        # Ragged last tiles: out-of-range rows of x hold undefined data, but
        # they only flow through independent matmul rows / pointwise math and
        # are masked on writeback -> benign.
        y = jnp.dot(x_ref[...], w_ref[...], preferred_element_type=jnp.float32)
        y = y + b_ref[...].astype(jnp.float32)
        a = y[:, :tn]
        g = y[:, tn:]
        e = jnp.exp(-g)                                   # EUP
        if approx_sigmoid:
            sig = pl.reciprocal(1.0 + e, approx=True)     # EUP vrcp, off the VALU
        else:
            sig = 1.0 / (1.0 + e)                         # exact path
        o_ref[...] = jnp.maximum(a * sig, 0.0).astype(o_ref.dtype)

    return kernel


def glu_projector(img_patches, weight_t, bias, *,
                  cast_f32_to_bf16: bool = True,
                  approx_sigmoid=None,
                  tile_m=None, tile_n=None):
    """Fused Linear(vision_dim -> 2*llm_dim, bias) -> GLU(dim=-1) -> ReLU.

    img_patches: (..., vision_dim)
    weight_t:    (vision_dim, 2*llm_dim)  (transpose of the torch Linear weight)
    bias:        (2*llm_dim,)
    returns:     (..., llm_dim), dtype of img_patches
    """
    *lead, vision_dim = img_patches.shape
    assert weight_t.shape[0] == vision_dim, (weight_t.shape, vision_dim)
    two_llm = weight_t.shape[1]
    assert two_llm % 2 == 0 and bias.shape == (two_llm,)
    llm_dim = two_llm // 2

    m = math.prod(lead) if lead else 1
    out_dtype = img_patches.dtype
    x2d = img_patches.reshape(m, vision_dim)

    # --- MXU operand dtype: bf16 operands (f32 accumulation) unless disabled.
    x_mxu = x2d.astype(jnp.bfloat16) if (cast_f32_to_bf16 and x2d.dtype == jnp.float32) else x2d
    w_src = (weight_t.astype(jnp.bfloat16)
             if (cast_f32_to_bf16 and weight_t.dtype == jnp.float32) else weight_t)
    if approx_sigmoid is None:
        approx_sigmoid = (jnp.dtype(x_mxu.dtype) == jnp.dtype(jnp.bfloat16))

    xb = jnp.dtype(x_mxu.dtype).itemsize
    wb = jnp.dtype(w_src.dtype).itemsize
    ob = jnp.dtype(out_dtype).itemsize

    # --- Per-generation VMEM budget (v7x: 64 MiB physical; v5e/v6e: 128 MiB).
    try:
        vmem_phys = int(pltpu.get_tpu_info().vmem_capacity_bytes)
    except Exception:
        vmem_phys = 64 * 1024 * 1024
    vmem_cap = vmem_phys * 3 // 4            # headroom for compiler scratch
    tile_budget = vmem_cap * 9 // 10

    # --- Tile sizing (ragged last tiles via cdiv on both axes).
    row_pack = max(32 // xb, 32 // ob)       # sublane packing (8 f32 / 16 bf16)
    tm_cap = _round_up(m, row_pack)
    tn_cap = llm_dim if llm_dim < 128 else _round_up(llm_dim, 128)
    tm = min(tm_cap, tile_m if tile_m else (512 if vmem_phys >= (96 << 20) else 256))
    tm = max(row_pack, _round_up(tm, row_pack))
    tn = min(tn_cap, _round_up(tile_n, 128)) if tile_n else tn_cap

    def _vmem_usage(tm_, tn_):
        return (2 * tm_ * vision_dim * xb          # x tile (double buffered)
                + 2 * vision_dim * (2 * tn_) * wb  # fused W tile (double buffered)
                + 2 * 8 * (2 * tn_) * 4            # fused bias tile (8-sublane pad)
                + 2 * tm_ * tn_ * ob               # output tile (double buffered)
                + 4 * tm_ * tn_ * 4)               # f32 intermediates

    while _vmem_usage(tm, tn) > tile_budget:
        if tn > 128 and 4 * tn >= tm:
            tn = max(128, _round_up(tn // 2, 128))
        elif tm > row_pack:
            tm = max(row_pack, _round_up(tm // 2, row_pack))
        elif tn > 128:
            tn = max(128, _round_up(tn // 2, 128))
        else:
            break

    grid_m = pl.cdiv(m, tm)
    grid_n = pl.cdiv(llm_dim, tn)

    # Keep >= 2 grid steps when possible so both v7x TensorCores get work.
    if grid_m * grid_n == 1 and m > row_pack:
        tm = max(row_pack, _round_up(pl.cdiv(m, 2), row_pack))
        grid_m = pl.cdiv(m, tm)

    # --- Loop-nest orientation: keep resident the operand whose streaming peer
    #     causes the least total HBM traffic.
    x_bytes = m * vision_dim * xb
    w_bytes = vision_dim * 2 * grid_n * tn * wb
    traffic_w_res = w_bytes + (x_bytes if grid_m == 1 else grid_n * x_bytes)
    traffic_x_res = x_bytes + (w_bytes if grid_n == 1 else grid_m * w_bytes)
    if traffic_w_res != traffic_x_res:
        w_resident = traffic_w_res < traffic_x_res
    else:
        w_resident = grid_n >= grid_m        # tie: bigger leading axis (megacore)

    # --- v7x megacore: make the leading (sharded) axis even when it is cheap.
    if w_resident and grid_n > 1 and grid_n % 2 == 1:
        tn_try = max(128, _round_up(pl.cdiv(llm_dim, grid_n + 1), 128))
        if pl.cdiv(llm_dim, tn_try) % 2 == 0 and _vmem_usage(tm, tn_try) <= tile_budget:
            tn, grid_n = tn_try, pl.cdiv(llm_dim, tn_try)
    if (not w_resident) and grid_m > 1 and grid_m % 2 == 1:
        tm_try = max(row_pack, _round_up(pl.cdiv(m, grid_m + 1), row_pack))
        if pl.cdiv(m, tm_try) % 2 == 0 and _vmem_usage(tm_try, tn) <= tile_budget:
            tm, grid_m = tm_try, pl.cdiv(m, tm_try)

    # --- Fuse the two GLU halves per output-column tile: one RHS DMA stream
    #     and one MXU LHS push per tile.  (One-time wrapper prep; a real model
    #     would store the projector weight pre-fused.)
    llm_pad = grid_n * tn
    wa, wg = w_src[:, :llm_dim], w_src[:, llm_dim:]
    ba, bg = bias[:llm_dim], bias[llm_dim:]
    if llm_pad != llm_dim:
        pad = llm_pad - llm_dim
        wa = jnp.pad(wa, ((0, 0), (0, pad)))
        wg = jnp.pad(wg, ((0, 0), (0, pad)))
        ba = jnp.pad(ba, (0, pad))
        bg = jnp.pad(bg, (0, pad))
    w_fused = jnp.concatenate(
        [wa.reshape(vision_dim, grid_n, tn), wg.reshape(vision_dim, grid_n, tn)],
        axis=2).reshape(vision_dim, 2 * llm_pad)
    b_fused = jnp.concatenate(
        [ba.reshape(1, grid_n, tn), bg.reshape(1, grid_n, tn)],
        axis=2).reshape(1, 2 * llm_pad)

    # --- Grid / BlockSpecs for the chosen orientation.
    # TODO(synk): single-buffer the resident weight tile (pl.Buffered(1)) once
    # top-level pallas_call reliably honors pipeline_mode; the VMEM budget above
    # conservatively assumes double buffering instead.
    if w_resident:                       # grid = (out-col tiles, row tiles): W read once
        grid = (grid_n, grid_m)
        x_map = lambda j, i: (i, 0)
        w_map = lambda j, i: (0, j)
        o_map = lambda j, i: (i, j)
    else:                                # grid = (row tiles, out-col tiles): x read once
        grid = (grid_m, grid_n)
        x_map = lambda i, j: (i, 0)
        w_map = lambda i, j: (0, j)
        o_map = lambda i, j: (i, j)

    usage = _vmem_usage(tm, tn)
    vmem_limit = int(min(vmem_cap, max(usage * 3 // 2, 32 * 1024 * 1024)))

    # Final schedule-accurate traffic for the cost hint.
    w_bytes = vision_dim * 2 * llm_pad * wb
    if w_resident:
        hbm_traffic = w_bytes + (x_bytes if grid_m == 1 else grid_n * x_bytes)
    else:
        hbm_traffic = x_bytes + (w_bytes if grid_n == 1 else grid_m * w_bytes)
    cost = pl.CostEstimate(
        flops=2 * m * vision_dim * two_llm + 8 * m * llm_dim,
        transcendentals=(2 if approx_sigmoid else 1) * m * llm_dim,
        bytes_accessed=int(hbm_traffic
                           + 2 * llm_pad * jnp.dtype(bias.dtype).itemsize
                           + m * llm_dim * ob),
    )

    out = pl.pallas_call(
        _make_glu_kernel(tn, approx_sigmoid),
        out_shape=jax.ShapeDtypeStruct((m, llm_dim), out_dtype),
        grid_spec=pltpu.PrefetchScalarGridSpec(
            num_scalar_prefetch=0,
            grid=grid,
            in_specs=[
                pl.BlockSpec((tm, vision_dim), x_map),       # activation rows
                pl.BlockSpec((vision_dim, 2 * tn), w_map),   # fused [W_a | W_g] tile
                pl.BlockSpec((1, 2 * tn), w_map),            # fused [b_a | b_g] tile
            ],
            out_specs=pl.BlockSpec((tm, tn), o_map),
        ),
        compiler_params=pltpu.CompilerParams(
            dimension_semantics=("parallel", "parallel"),
            vmem_limit_bytes=vmem_limit),
        cost_estimate=cost,
    )(x_mxu, w_fused, b_fused)

    return out.reshape(*lead, llm_dim)


def _reference(img_patches, weight_t, bias):
    """Pure-JAX reference (full f32 precision)."""
    x = img_patches.astype(jnp.float32)
    y = jnp.dot(x, weight_t.astype(jnp.float32),
                precision=jax.lax.Precision.HIGHEST) + bias.astype(jnp.float32)
    llm_dim = weight_t.shape[1] // 2
    a, g = y[..., :llm_dim], y[..., llm_dim:]
    return jnp.maximum(a * jax.nn.sigmoid(g), 0.0)


if __name__ == "__main__":
    # Small shapes consistent with the module: batch=2, num_patches=8,
    # vision_dim=32, llm_dim=64 (Linear out = 2*llm_dim = 128).
    batch, num_patches, vision_dim, llm_dim = 2, 8, 32, 64

    key = jax.random.PRNGKey(0)
    kx, kw, kb = jax.random.split(key, 3)

    img_patches = jax.random.normal(kx, (batch, num_patches, vision_dim), dtype=jnp.float32)
    # torch Linear weight is (2*llm_dim, vision_dim); the kernel takes its transpose.
    weight_t = (jax.random.normal(kw, (vision_dim, 2 * llm_dim), dtype=jnp.float32)
                * (1.0 / jnp.sqrt(vision_dim)))
    bias = jax.random.normal(kb, (2 * llm_dim,), dtype=jnp.float32) * 0.01

    ref32 = _reference(img_patches, weight_t, bias)

    # 1) Exact f32 path (no bf16 cast, exact sigmoid) -> tight tolerance.
    out32 = jax.block_until_ready(
        glu_projector(img_patches, weight_t, bias, cast_f32_to_bf16=False))
    assert out32.shape == (batch, num_patches, llm_dim), out32.shape
    assert jnp.allclose(out32, ref32, atol=1e-3, rtol=1e-3), \
        float(jnp.max(jnp.abs(out32 - ref32)))

    # 2) Default fast path: f32 in/out, bf16 MXU operands + EUP approx sigmoid.
    out_fast = jax.block_until_ready(glu_projector(img_patches, weight_t, bias))
    assert out_fast.shape == (batch, num_patches, llm_dim), out_fast.shape
    assert jnp.allclose(out_fast, ref32, atol=5e-2, rtol=5e-2)

    # 3) Native bf16 inputs (straight to the MXU, f32 accumulation).
    xb16 = img_patches.astype(jnp.bfloat16)
    wb16 = weight_t.astype(jnp.bfloat16)
    bb16 = bias.astype(jnp.bfloat16)
    out_bf = jax.block_until_ready(glu_projector(xb16, wb16, bb16))
    ref_bf = _reference(xb16, wb16, bb16)
    assert out_bf.shape == (batch, num_patches, llm_dim), out_bf.shape
    assert jnp.allclose(out_bf.astype(jnp.float32), ref_bf, atol=5e-2, rtol=5e-2)

    print("KERNEL_OK")
</pallas_src>

<mosaic_0001>
module attributes {stable_mosaic.version = 11 : i64} {
  func.func @kernel(%arg0: i32, %arg1: i32, %arg2: memref<8x32xf32, #tpu.memory_space<vmem>>, %arg3: memref<32x128xf32, #tpu.memory_space<vmem>>, %arg4: memref<1x128xf32, #tpu.memory_space<vmem>>, %arg5: memref<8x64xf32, #tpu.memory_space<vmem>>) attributes {dimension_semantics = [#tpu.dimension_semantics<parallel>, #tpu.dimension_semantics<parallel>], iteration_bounds = array<i64: 2, 1>, scalar_prefetch = 0 : i64, scratch_operands = 0 : i64, tpu.core_type = #tpu.core_type<tc>, window_params = [{transform_indices = @transform_0, window_bounds = array<i64: 8, 32>}, {transform_indices = @transform_1, window_bounds = array<i64: 32, 128>}, {transform_indices = @transform_2, window_bounds = array<i64: 1, 128>}, {transform_indices = @transform_3, window_bounds = array<i64: 8, 64>}]} {
    %c0 = arith.constant 0 : index
    %c0_0 = arith.constant 0 : index
    %0 = vector.load %arg2[%c0, %c0_0] : memref<8x32xf32, #tpu.memory_space<vmem>>, vector<8x32xf32>
    %c0_1 = arith.constant 0 : index
    %c0_2 = arith.constant 0 : index
    %1 = vector.load %arg3[%c0_1, %c0_2] : memref<32x128xf32, #tpu.memory_space<vmem>>, vector<32x128xf32>
    %cst = arith.constant dense<0.000000e+00> : vector<8x128xf32>
    %2 = tpu.matmul %0, %1, %cst {dimension_numbers = #tpu.dot_dimension_numbers<[1], [0], [0], [1], [0, 0, 1, 1], [], []>} : vector<8x32xf32>, vector<32x128xf32>, vector<8x128xf32> -> vector<8x128xf32>
    %c0_3 = arith.constant 0 : index
    %c0_4 = arith.constant 0 : index
    %3 = vector.load %arg4[%c0_3, %c0_4] : memref<1x128xf32, #tpu.memory_space<vmem>>, vector<1x128xf32>
    %4 = vector.broadcast %3 : vector<1x128xf32> to vector<8x128xf32>
    %5 = arith.addf %2, %4 : vector<8x128xf32>
    %6 = vector.extract_strided_slice %5 {offsets = [0, 0], sizes = [8, 64], strides = [1, 1]} : vector<8x128xf32> to vector<8x64xf32>
    %7 = vector.extract_strided_slice %5 {offsets = [0, 64], sizes = [8, 64], strides = [1, 1]} : vector<8x128xf32> to vector<8x64xf32>
    %cst_5 = arith.constant 0.000000e+00 : f32
    %8 = vector.broadcast %cst_5 : f32 to vector<8x64xf32>
    %9 = arith.subf %8, %7 : vector<8x64xf32>
    %10 = math.exp %9 : vector<8x64xf32>
    %cst_6 = arith.constant 1.000000e+00 : f32
    %11 = vector.broadcast %cst_6 : f32 to vector<8x64xf32>
    %12 = arith.addf %11, %10 : vector<8x64xf32>
    %cst_7 = arith.constant 1.000000e+00 : f32
    %13 = vector.broadcast %cst_7 : f32 to vector<8x64xf32>
    %14 = arith.divf %13, %12 : vector<8x64xf32>
    %15 = arith.mulf %6, %14 : vector<8x64xf32>
    %cst_8 = arith.constant 0.000000e+00 : f32
    %16 = vector.broadcast %cst_8 : f32 to vector<8x64xf32>
    %17 = arith.maximumf %15, %16 : vector<8x64xf32>
    %c0_9 = arith.constant 0 : index
    %c0_10 = arith.constant 0 : index
    %18 = vector.load %arg5[%c0_9, %c0_10] : memref<8x64xf32, #tpu.memory_space<vmem>>, vector<8x64xf32>
    tpu.vector_store %arg5[%c0_9, %c0_10], %17 {strides = array<i32>} : memref<8x64xf32, #tpu.memory_space<vmem>>, vector<8x64xf32>,
    return
  }
  func.func @transform_0(%arg0: i32, %arg1: i32) -> (i32, i32) {
    %c0_i32 = arith.constant 0 : i32
    %c0_i32_0 = arith.constant 0 : i32
    return %arg0, %c0_i32 : i32, i32
  }
  func.func @transform_1(%arg0: i32, %arg1: i32) -> (i32, i32) {
    %c0_i32 = arith.constant 0 : i32
    %c0_i32_0 = arith.constant 0 : i32
    return %c0_i32, %arg1 : i32, i32
  }
  func.func @transform_2(%arg0: i32, %arg1: i32) -> (i32, i32) {
    %c0_i32 = arith.constant 0 : i32
    %c0_i32_0 = arith.constant 0 : i32
    return %c0_i32, %arg1 : i32, i32
  }
  func.func @transform_3(%arg0: i32, %arg1: i32) -> (i32, i32) {
    %c0_i32 = arith.constant 0 : i32
    return %arg0, %arg1 : i32, i32
  }
}

</mosaic_0001>

<llo_original>
// kernel: tpu_custom_call.1
$region0: #{tpu_custom_call.1}
  #allocation0 [shape = 'u32[]', space=smem, size = 0x4, offset = 0x4, fixed_abs, tag = 'smem constant byte address 0x4 - core index']
  #allocation1 [shape = 'u32[144,128]{1,0:T(1,128)}', space=vmem, size = 0x12000, scoped, tag = 'internal scratch']
  %s0 = inlined_call_operand.hbm [shape: f32[16,32], index: 0, kind: input, shape index: {}]
  %s1 = inlined_call_operand.hbm [shape: f32[32,128], index: 1, kind: input, shape index: {}]
  %s2 = inlined_call_operand.vmem [shape: f32[1,128], index: 2, kind: input, shape index: {}]
  %s3 = inlined_call_operand.hbm [shape: f32[16,64], index: 3, kind: output, shape index: {}]
  %s4 = sld [smem:[#allocation0]]
  $region53: #{tpu_custom_call.1} parent=0
    _
  %s6 = ssub.s32 1, %s4
  %s7 = scalar_select 0, %s6, %s4
  $region1: #{tpu_custom_call.1} parent=0
    #allocation2 [shape = 'u8[8192]{0}', space=vmem, size = 0x2000, scoped, tag = 'input window, operand 0']
    #allocation3 [shape = 's32[2]{0}', space=sflag, size = 0x8, scoped, tag = 'scoped memory for tpu_custom_call.1']
    #allocation4 [shape = 's32[2]{0}', space=sflag, size = 0x8, scoped, tag = 'scoped memory for tpu_custom_call.1']
    #allocation5 [shape = 'u8[16384]{0}', space=vmem, size = 0x4000, scoped, tag = 'input window, operand 1, single buffered']
    #allocation6 [shape = 's32[1]{0}', space=sflag, size = 0x4, scoped, tag = 'scoped memory for tpu_custom_call.1']
    #allocation7 [shape = 'u8[8192]{0}', space=vmem, size = 0x2000, scoped, tag = 'output window, operand 0']
    %8 = vsyncpa [#allocation3], 0
    %s9 = scalar_lea.sflag [#allocation3], 1
    %10 = vsyncpa %s9, 0
    %11 = vsyncpa [#allocation6], 0
    %12 = vsyncpa [#allocation4], 0
    %s13 = scalar_lea.sflag [#allocation4], 1
    %14 = vsyncpa %s13, 0
    loop: start=0, step=1, limit=4
    $region2: #{tpu_custom_call.1} parent=1 // loop_pre_header
      _
    $region3: #{tpu_custom_call.1} parent=1 // loop_header
      %s16 = sphi 0, %s20
      %p17 = scmp.ge.s32.totalorder %s16, 4
      %s23 = sphi 0, %s35
      %s24 = sphi 0, %s31
      %s25 = sphi 0, %s23
      %s26 = sphi 0, %s24
      %s27 = sphi 0, %s25
      %s28 = sphi 0, %s26
      %s38 = sphi 0, %s40
      %s41 = sphi 0, %s38
      %s42 = sphi 0, %s41
      %s58 = sphi 0, %s42
      %s64 = sphi 0, %s66
      %s67 = sphi 0, %s64
      %s68 = sphi 0, %s67
      %s84 = sphi 0, %s68
      %s90 = sphi 0, %s92
      %s93 = sphi 0, %s90
      %s94 = sphi 0, %s93
      %s110 = sphi 0, %s94
      %s118 = sphi 0, %s120
      %s121 = sphi 0, %s118
      %s122 = sphi 0, %s121
      %s138 = sphi 0, %s122
    $region4: #{tpu_custom_call.1} parent=1 // loop_header_branch
      %19 = sbr.rel (%p17) target = $region8
    $region5: #{tpu_custom_call.1} parent=1 // loop_body
      %s21 = ssub.s32 %s16, 1
      %s22 = ssub.s32 %s16, 2
      %s29 = sadd.s32 1, %s24
      %p30 = scmp.ge.s32.totalorder %s29, 1
      %s31 = scalar_select %p30, 0, %s29
      %s32 = sadd.s32 1, %s23
      %s33 = scalar_select %p30, %s32, %s23
      %p34 = scmp.ge.s32.totalorder %s33, 2
      %s35 = scalar_select %p34, 0, %s33
      %s36 = ssub.s32 %s23, %s35
      %p37 = scmp.eq.s32.totalorder %s36, 0
      %s39 = sadd.s32 %s38, 1
      %s40 = scalar_select %p37, %s38, %s39
      %p43 = pneg %p37
      %p44 = scmp.eq.s32.totalorder %s16, 1
      %p45 = por %p43, %p44
      %p46 = scmp.ne.s32.totalorder %s38, %s41
      %p47 = scmp.eq.s32.totalorder %s16, 0
      %p48 = por %p46, %p47
      %p49 = scmp.ne.s32.totalorder %s38, %s41
      %p50 = scmp.eq.s32.totalorder %s21, 1
      %p51 = por %p49, %p50
      %p52 = scmp.ne.s32.totalorder %s41, %s42
      %p53 = scmp.eq.s32.totalorder %s21, 0
      %p54 = por %p52, %p53
      %p55 = scmp.ne.s32.totalorder %s41, %s42
      %p56 = scmp.eq.s32.totalorder %s22, 1
      %p57 = por %p55, %p56
      %p59 = scmp.ne.s32.totalorder %s42, %s58
      %p60 = scmp.eq.s32.totalorder %s22, 0
      %p61 = por %p59, %p60
      %s62 = ssub.s32 %s24, %s31
      %p63 = scmp.eq.s32.totalorder %s62, 0
      %s65 = sadd.s32 %s64, 1
      %s66 = scalar_select %p63, %s64, %s65
      %p69 = pneg %p63
      %p70 = scmp.eq.s32.totalorder %s16, 1
      %p71 = por %p69, %p70
      %p72 = scmp.ne.s32.totalorder %s64, %s67
      %p73 = scmp.eq.s32.totalorder %s16, 0
      %p74 = por %p72, %p73
      %p75 = scmp.ne.s32.totalorder %s64, %s67
      %p76 = scmp.eq.s32.totalorder %s21, 1
      %p77 = por %p75, %p76
      %p78 = scmp.ne.s32.totalorder %s67, %s68
      %p79 = scmp.eq.s32.totalorder %s21, 0
      %p80 = por %p78, %p79
      %p81 = scmp.ne.s32.totalorder %s67, %s68
      %p82 = scmp.eq.s32.totalorder %s22, 1
      %p83 = por %p81, %p82
      %p85 = scmp.ne.s32.totalorder %s68, %s84
      %p86 = scmp.eq.s32.totalorder %s22, 0
      %p87 = por %p85, %p86
      %s88 = ssub.s32 %s24, %s31
      %p89 = scmp.eq.s32.totalorder %s88, 0
      %s91 = sadd.s32 %s90, 1
      %s92 = scalar_select %p89, %s90, %s91
      %p95 = pneg %p89
      %p96 = scmp.eq.s32.totalorder %s16, 1
      %p97 = por %p95, %p96
      %p98 = scmp.ne.s32.totalorder %s90, %s93
      %p99 = scmp.eq.s32.totalorder %s16, 0
      %p100 = por %p98, %p99
      %p101 = scmp.ne.s32.totalorder %s90, %s93
      %p102 = scmp.eq.s32.totalorder %s21, 1
      %p103 = por %p101, %p102
      %p104 = scmp.ne.s32.totalorder %s93, %s94
      %p105 = scmp.eq.s32.totalorder %s21, 0
      %p106 = por %p104, %p105
      %p107 = scmp.ne.s32.totalorder %s93, %s94
      %p108 = scmp.eq.s32.totalorder %s22, 1
      %p109 = por %p107, %p108
      %p111 = scmp.ne.s32.totalorder %s94, %s110
      %p112 = scmp.eq.s32.totalorder %s22, 0
      %p113 = por %p111, %p112
      %s114 = ssub.s32 %s23, %s35
      %s115 = ssub.s32 %s24, %s31
      %s116 = sor.u32 %s114, %s115
      %p117 = scmp.eq.s32.totalorder %s116, 0
      %s119 = sadd.s32 %s118, 1
      %s120 = scalar_select %p117, %s118, %s119
      %p123 = pneg %p117
      %p124 = scmp.eq.s32.totalorder %s16, 1
      %p125 = por %p123, %p124
      %p126 = scmp.ne.s32.totalorder %s118, %s121
      %p127 = scmp.eq.s32.totalorder %s16, 0
      %p128 = por %p126, %p127
      %p129 = scmp.ne.s32.totalorder %s118, %s121
      %p130 = scmp.eq.s32.totalorder %s21, 1
      %p131 = por %p129, %p130
      %p132 = scmp.ne.s32.totalorder %s121, %s122
      %p133 = scmp.eq.s32.totalorder %s21, 0
      %p134 = por %p132, %p133
      %p135 = scmp.ne.s32.totalorder %s121, %s122
      %p136 = scmp.eq.s32.totalorder %s22, 1
      %p137 = por %p135, %p136
      %p139 = scmp.ne.s32.totalorder %s122, %s138
      %p140 = scmp.eq.s32.totalorder %s22, 0
      %p141 = por %p139, %p140
      %p142 = scmp.le.s32.totalorder 1, %s16
      %p143 = scmp.lt.s32.totalorder %s16, 3
      %p144 = pnand %p142, %p143
      %p145 = pneg %p144
      // Predicated region
      $region9: #{tpu_custom_call.1} parent=5 // pred_check
        _
      $region10: #{tpu_custom_call.1} parent=5 // pred_check_branch
        %147 = sbr.rel (%p144) target = $region12
      $region11: #{tpu_custom_call.1} parent=5 // pred_region
        %s148 = ssub.s32 %s16, 1
        // Predicated region
        $region13: #{tpu_custom_call.1} parent=11 // pred_check
          %p149 = pneg %p80
        $region14: #{tpu_custom_call.1} parent=11 // pred_check_branch
          %151 = sbr.rel (%p149) target = $region16
        $region15: #{tpu_custom_call.1} parent=11 // pred_region
          %s153 = ssub.s32 512, 512
          %154 = vsyncadd [#allocation6], %s153
          %s155 = smul.addr %s26, 128
          %s156 = scalar_lea.hbm %s1, %s155
          %s157 = sshll.u32 [#allocation5], 4
          %s158 = int_to_ptr.vmem [resolvable:$true] %s157
          %163 = dma.hbm_to_vmem [thread:$0]  %s156, 512, %s158, [#allocation6], 128, 128, 8
        $region16: #{tpu_custom_call.1} parent=11 // pred_fallthru
          _
        // Predicated region
        $region17: #{tpu_custom_call.1} parent=11 // pred_check
          %p164 = pneg %p106
        $region18: #{tpu_custom_call.1} parent=11 // pred_check_branch
          %166 = sbr.rel (%p164) target = $region20
        $region19: #{tpu_custom_call.1} parent=11 // pred_region
          %p167 = scmp.lt.s32.totalorder %s26, 0
          %s168 = scalar_select %p167, %s26, 0
          %s169 = scalar_lea.vmem %s2, %s168
        $region20: #{tpu_custom_call.1} parent=11 // pred_fallthru
          _
      $region12: #{tpu_custom_call.1} parent=5 // pred_fallthru
        _
      %p170 = scmp.lt.s32.totalorder %s16, 2
      // Predicated region
      $region21: #{tpu_custom_call.1} parent=5 // pred_check
        %p171 = pneg %p170
      $region22: #{tpu_custom_call.1} parent=5 // pred_check_branch
        %173 = sbr.rel (%p171) target = $region24
      $region23: #{tpu_custom_call.1} parent=5 // pred_region
        // Predicated region
        $region25: #{tpu_custom_call.1} parent=23 // pred_check
          %p174 = pneg %p48
        $region26: #{tpu_custom_call.1} parent=23 // pred_check_branch
          %176 = sbr.rel (%p174) target = $region28
        $region27: #{tpu_custom_call.1} parent=23 // pred_region
          %s177 = sand.u32 %s38, 1
          %s178 = scalar_lea.sflag [#allocation3], %s177
          %s179 = sand.u32 %s38, 1
          %s180 = smul.addr %s179, 8
          %s181 = scalar_lea.vmem [#allocation2], %s180
          %s183 = ssub.s32 128, 128
          %184 = vsyncadd %s178, %s183
          %s185 = smul.addr %s23, 128
          %s186 = scalar_lea.hbm %s0, %s185
          %s188 = sshll.u32 %s181, 4
          %s189 = int_to_ptr.vmem [resolvable:$true] %s188
          %191 = dma.hbm_to_vmem [thread:$0]  %s186, 128, %s189, %s178
        $region28: #{tpu_custom_call.1} parent=23 // pred_fallthru
          _
      $region24: #{tpu_custom_call.1} parent=5 // pred_fallthru
        _
      %p192 = scmp.le.s32.totalorder 1, %s16
      %p193 = scmp.lt.s32.totalorder %s16, 3
      %p194 = pnand %p192, %p193
      %p195 = pneg %p194
      // Predicated region
      $region29: #{tpu_custom_call.1} parent=5 // pred_check
        _
      $region30: #{tpu_custom_call.1} parent=5 // pred_check_branch
        %197 = sbr.rel (%p194) target = $region32
      $region31: #{tpu_custom_call.1} parent=5 // pred_region
        %s198 = ssub.s32 %s16, 1
        %s199 = sand.u32 %s41, 1
        %s200 = scalar_lea.sflag [#allocation3], %s199
        %s201 = sand.u32 %s41, 1
        %s202 = smul.addr %s201, 8
        %s203 = scalar_lea.vmem [#allocation2], %s202
        // Predicated region
        $region33: #{tpu_custom_call.1} parent=31 // pred_check
          %p204 = pneg %p54
        $region34: #{tpu_custom_call.1} parent=31 // pred_check_branch
          %206 = sbr.rel (%p204) target = $region36
        $region35: #{tpu_custom_call.1} parent=31 // pred_region
          %207 = dma.done %s200, 128
        $region36: #{tpu_custom_call.1} parent=31 // pred_fallthru
          _
        // Predicated region
        $region37: #{tpu_custom_call.1} parent=31 // pred_check
          %p208 = pneg %p80
        $region38: #{tpu_custom_call.1} parent=31 // pred_check_branch
          %210 = sbr.rel (%p208) target = $region40
        $region39: #{tpu_custom_call.1} parent=31 // pred_region
          %211 = dma.done [#allocation6], 512
        $region40: #{tpu_custom_call.1} parent=31 // pred_fallthru
          _
        %s212 = sand.u32 %s41, 1
        %s213 = scalar_lea.sflag [#allocation3], %s212
        %s214 = sand.u32 %s41, 1
        %s215 = smul.addr %s214, 8
        %s216 = scalar_lea.vmem [#allocation2], %s215
        %p217 = pneg %p54
        %p218 = pneg %p51
        %p219 = pneg %p80
        %p220 = pneg %p77
        %p221 = scmp.lt.s32.totalorder %s26, 0
        %s222 = scalar_select %p221, %s26, 0
        %s223 = scalar_lea.vmem %s2, %s222
        %p224 = pneg %p106
        %p225 = pneg %p103
        %p226 = pneg %p134
        %p227 = pneg %p131
        %s228 = sand.u32 %s121, 1
        %s229 = scalar_lea.sflag [#allocation4], %s228
        %s230 = sand.u32 %s121, 1
        %s231 = smul.addr %s230, 8
        %s232 = scalar_lea.vmem [#allocation7], %s231
        %p233 = scmp.lt.s32.totalorder %s26, 0
        %s234 = scalar_select %p233, %s26, 0
        %s235 = scalar_lea.vmem %s2, %s234
        %v236 = vld [vmem:[%s203] sm:$0xff]
        %v237 = vld [vmem:[#allocation5] sm:$0xff]
        %v238 = vld [vmem:[#allocation5 + $0x8] sm:$0xff]
        %v239 = vld [vmem:[#allocation5 + $0x10] sm:$0xff]
        %v240 = vld [vmem:[#allocation5 + $0x18] sm:$0xff]
        %v241 = vld [vmem:[%s235] sm:$0x1]
        %v243 = vlaneseq
        %v244 = vshrl.u32 %v243, 7
        %v245 = vsub.s32 0, %v244
        %v246 = vrot.slane %v241, %v245
        %vm248 = vcmask 261120
        %v250 = vsel %vm248, %v236, 0
        %252 = vmatprep.subr.mxu0 0.0
        %253 = vmatpush1.msra.mxu0 %v237
        %254 = vmatprep.subr.mxu0 0.0
        %255 = vmatpush1.msra.mxu0 %v238
        %256 = vmatprep.subr.mxu0 0.0
        %257 = vmatpush1.msra.mxu0 %v239
        %258 = vmatprep.subr.mxu0 0.0
        %259 = vmatpush1.msra.mxu0 %v240
        %260 = vmatprep.subr.mxu0 0.0
        %261 = vmatpush1.msra.mxu0 0.0
        %262 = vmatprep.subr.mxu0 0.0
        %263 = vmatpush1.msra.mxu0 0.0
        %264 = vmatprep.subr.mxu0 0.0
        %265 = vmatpush1.msra.mxu0 0.0
        %266 = vmatprep.subr.mxu0 0.0
        %267 = vmatpush1.msra.mxu0 0.0
        %268 = vmatprep.subr.mxu0 0.0
        %269 = vmatpush1.msra.mxu0 0.0
        %270 = vmatprep.subr.mxu0 0.0
        %271 = vmatpush1.msra.mxu0 0.0
        %272 = vmatprep.subr.mxu0 0.0
        %273 = vmatpush1.msra.mxu0 0.0
        %274 = vmatprep.subr.mxu0 0.0
        %275 = vmatpush1.msra.mxu0 0.0
        %276 = vmatprep.subr.mxu0 0.0
        %277 = vmatpush1.msra.mxu0 0.0
        %278 = vmatprep.subr.mxu0 0.0
        %279 = vmatpush1.msra.mxu0 0.0
        %280 = vmatprep.subr.mxu0 0.0
        %281 = vmatpush1.msra.mxu0 0.0
        %282 = vmatprep.subr.mxu0 0.0
        %283 = vmatpush1.msra.mxu0 0.0
        %284 = vmatprep.subr.mxu0 0.0
        %285 = vmatpush1.msra.mxu0 0.0
        %286 = vmatprep.subr.mxu0 0.0
        %287 = vmatpush1.msra.mxu0 0.0
        %288 = vmatprep.subr.mxu0 0.0
        %289 = vmatpush1.msra.mxu0 0.0
        %290 = vmatprep.subr.mxu0 0.0
        %291 = vmatpush1.msra.mxu0 0.0
        %292 = vmatprep.subr.mxu0 0.0
        %293 = vmatpush1.msra.mxu0 0.0
        %294 = vmatprep.subr.mxu0 0.0
        %295 = vmatpush1.msra.mxu0 0.0
        %296 = vmatprep.subr.mxu0 0.0
        %297 = vmatpush1.msra.mxu0 0.0
        %298 = vmatprep.subr.mxu0 0.0
        %299 = vmatpush1.msra.mxu0 0.0
        %300 = vmatprep.subr.mxu0 0.0
        %301 = vmatpush1.msra.mxu0 0.0
        %302 = vmatprep.subr.mxu0 0.0
        %303 = vmatpush1.msra.mxu0 0.0
        %304 = vmatprep.subr.mxu0 0.0
        %305 = vmatpush1.msra.mxu0 0.0
        %306 = vmatprep.subr.mxu0 0.0
        %307 = vmatpush1.msra.mxu0 0.0
        %308 = vmatprep.subr.mxu0 0.0
        %309 = vmatpush1.msra.mxu0 0.0
        %310 = vmatprep.subr.mxu0 0.0
        %311 = vmatpush1.msra.mxu0 0.0
        %312 = vmatprep.subr.mxu0 0.0
        %313 = vmatpush1.msra.mxu0 0.0
        %314 = vmatprep.subr.mxu0 0.0
        %315 = vmatpush1.msra.mxu0 0.0
        %316 = vmatprep.mubr.f32.mxu0 0.0
        %317 = vmatmul.mubr.f32.gmra.mrb[0].mxu0 %v250
        %v318 = vpop.f32.mrb[0].mxu0
        %v319 = vadd.f32 %v246, %v318
        %v320 = vpop.f32.mrb[0].mxu0
        %321 = vdwg.mxu0
        %v322 = vsub.f32 0.0, %v319
        %v323 = vmul.f32 %v322, 1.442695
        %v324 = vpow.pop %v323
        %v325 = vadd.f32 %v324, 1.0
        %v326 = vrcp.pop %v325
        %v327 = vmul.f32 1.0, %v326
        %329 = vrot.lane.b32.xlu0 %v327, 64
        %v330 = vpop.permute.xlu0 %329
        %v332 = vmul.f32 %v319, %v330
        %v333 = vmax.f32 %v332, 0.0
        %vm334 = vcmask 523264
        %335 = vst.msk [vmem:[%s232] sm:$0xff] %vm334, %v333
        %s336 = sand.u32 %s121, 1
        %s337 = scalar_lea.sflag [#allocation4], %s336
        %s338 = sand.u32 %s121, 1
        %s339 = smul.addr %s338, 8
        %s340 = scalar_lea.vmem [#allocation7], %s339
        // Predicated region
        $region41: #{tpu_custom_call.1} parent=31 // pred_check
          %p341 = pneg %p131
        $region42: #{tpu_custom_call.1} parent=31 // pred_check_branch
          %343 = sbr.rel (%p341) target = $region44
        $region43: #{tpu_custom_call.1} parent=31 // pred_region
          %s345 = ssub.s32 128, 128
          %346 = vsyncadd %s337, %s345
          %s347 = sadd.s32 %s26, %s25
          %s348 = smul.addr %s347, 128
          %s349 = scalar_lea.hbm %s3, %s348
          %s351 = sshll.u32 %s340, 4
          %s352 = int_to_ptr.vmem [resolvable:$true] %s351
          %354 = dma.vmem_to_hbm [thread:$0]  %s352, 128, %s349, %s337
        $region44: #{tpu_custom_call.1} parent=31 // pred_fallthru
          _
      $region32: #{tpu_custom_call.1} parent=5 // pred_fallthru
        _
      %p355 = scmp.le.s32.totalorder 2, %s16
      // Predicated region
      $region45: #{tpu_custom_call.1} parent=5 // pred_check
        %p356 = pneg %p355
      $region46: #{tpu_custom_call.1} parent=5 // pred_check_branch
        %358 = sbr.rel (%p356) target = $region48
      $region47: #{tpu_custom_call.1} parent=5 // pred_region
        %s359 = ssub.s32 %s16, 2
        // Predicated region
        $region49: #{tpu_custom_call.1} parent=47 // pred_check
          %p360 = pneg %p137
        $region50: #{tpu_custom_call.1} parent=47 // pred_check_branch
          %362 = sbr.rel (%p360) target = $region52
        $region51: #{tpu_custom_call.1} parent=47 // pred_region
          %s363 = sand.u32 %s122, 1
          %s364 = scalar_lea.sflag [#allocation4], %s363
          %s365 = sand.u32 %s122, 1
          %s366 = smul.addr %s365, 8
          %s367 = scalar_lea.vmem [#allocation7], %s366
          %368 = dma.done %s364, 128
        $region52: #{tpu_custom_call.1} parent=47 // pred_fallthru
          _
      $region48: #{tpu_custom_call.1} parent=5 // pred_fallthru
        _
    $region6: #{tpu_custom_call.1} parent=1 // loop_footer
      %s20 = sadd.s32 1, %s16
    $region7: #{tpu_custom_call.1} parent=1 // loop_footer_branch
      %15 = sbr.rel target = $region3
    $region8: #{tpu_custom_call.1} parent=1 // loop_exit
      _
    %369 = vsyncpa [#allocation3], 1
    %s370 = scalar_lea.sflag [#allocation3], 1
    %371 = vsyncpa %s370, 1
    %372 = vsyncpa [#allocation6], 1
    %373 = vsyncpa [#allocation4], 1
    %s374 = scalar_lea.sflag [#allocation4], 1
    %375 = vsyncpa %s374, 1

</llo_original>
